<compile_context>
chip_gen: v7x
topology: tpu7x:2x2x1
jax: 0.10.0
libtpu: 0.0.40
codegen_flags: <defaults>
</compile_context>

<pallas_src>
import functools

import jax
import jax.numpy as jnp
from jax.experimental import pallas as pl
from jax.experimental.pallas import tpu as pltpu

LANE = 128                      # lane width (last-dim granularity)
SUBLANE = 8                     # sublane granularity (second-to-last dim)
NUM_CORES = 2                   # v7x has 2 TensorCores; harmless on v5e/v6e
DEFAULT_SCOPED_VMEM = 16 * 1024 * 1024   # v5e default scoped VMEM (v6e/v7x: 32 MiB)


def _round_up(x, m):
    return ((x + m - 1) // m) * m


def _choose_tm(M, block_m):
    """Batch-tile size: each tile <= block_m, at least NUM_CORES tiles when M is
    big enough (v7x megacore split), and minimal row padding at awkward M."""
    n_tiles = max(pl.cdiv(M, block_m), 1)
    if M >= NUM_CORES * SUBLANE:
        n_tiles = _round_up(max(n_tiles, NUM_CORES), NUM_CORES)
    return _round_up(pl.cdiv(M, n_tiles), SUBLANE)


def _fused_mlp_kernel(x_ref, *refs, relu_flags, compute_dtype):
    """refs = (w_0, ..., w_{n-1}, bias_packed, o_ref).

    x_ref: [tm, K0] (unpadded K); w_j: [K_j, N_j] pre-transposed (hidden N padded
    to 128, last N unpadded); bias_packed: [n_layers, N_max] f32; o_ref: [tm, N_out].
    All matmuls accumulate in f32; bias+ReLU are per-layer f32 epilogues.
    """
    o_ref = refs[-1]
    bias_ref = refs[-2]
    w_refs = refs[:-2]
    n_layers = len(relu_flags)

    h = x_ref[...].astype(compute_dtype)
    for j, apply_relu in enumerate(relu_flags):
        w = w_refs[j][...]
        nj = w.shape[1]
        acc = jnp.dot(h, w, preferred_element_type=jnp.float32)
        acc = acc + bias_ref[j:j + 1, :nj]            # (1, nj) f32 broadcast, once/layer
        if apply_relu:
            acc = jnp.maximum(acc, 0.0)
        # Feed the next MXU matmul in compute_dtype; keep the LAST layer in f32 so the
        # store doesn't take an avoidable bf16 round-trip.
        h = acc.astype(compute_dtype) if j + 1 < n_layers else acc
    o_ref[...] = h.astype(o_ref.dtype)


def init_mlp_params(key, layers):
    """Deterministic init mimicking nn.Linear shapes: W [out, in], b [out]."""
    params = []
    for j in range(len(layers) - 1):
        key, kw, kb = jax.random.split(key, 3)
        bound = 1.0 / jnp.sqrt(layers[j])
        w = jax.random.uniform(kw, (layers[j + 1], layers[j]), jnp.float32, -bound, bound)
        b = jax.random.uniform(kb, (layers[j + 1],), jnp.float32, -bound, bound)
        params.append((w, b))
    return params


def prepare_mlp_params(params, compute_dtype=jnp.bfloat16):
    """One-time prep (hoisted out of the forward path).

    * W transposed to [in, out] and cast to compute_dtype (bf16 default).
    * First layer: K left UNPADDED (so x never needs column padding).
    * Hidden layers: N zero-padded to a multiple of 128 (lane-dense intermediates);
      the next layer's K matches that padded width with zero rows.
    * Last layer: N left UNPADDED (store exactly out_features lanes).
    * All biases packed into one (n_layers, N_max) f32 array (zero in padded cols).
    Zero weight rows/cols + zero bias keep padded columns exactly zero end-to-end.
    """
    n = len(params)
    ws, n_widths = [], []
    for j, (w, b) in enumerate(params):
        out_f, in_f = w.shape
        in_p = in_f if j == 0 else n_widths[-1]
        out_p = out_f if j == n - 1 else _round_up(out_f, LANE)
        w_t = jnp.zeros((in_p, out_p), compute_dtype).at[:in_f, :out_f].set(
            w.T.astype(compute_dtype))
        ws.append(w_t)
        n_widths.append(out_p)
    n_max = max(n_widths)
    bias = jnp.zeros((n, n_max), jnp.float32)
    for j, (_, b) in enumerate(params):
        bias = bias.at[j, :b.shape[0]].set(b)
    return ws, bias


def mlp_forward_fused(ws, bias, x, relu_flags, *, block_m=512,
                      compute_dtype=jnp.bfloat16):
    """Fused MLP forward: one pallas_call for all layers, tiled over the batch."""
    M, K0 = x.shape
    assert K0 == ws[0].shape[0], "input width must match first-layer fan_in"
    out_features = ws[-1].shape[1]

    tm = _choose_tm(M, block_m)
    M_pad = _round_up(M, tm)
    if M_pad != M:                       # rows only; never a K-padding copy of x
        x = jnp.pad(x, ((0, M_pad - M), (0, 0)))

    # --- generation-aware VMEM admission, honest about default 2x double-buffering ---
    weight_bytes = 2 * sum(w.size * w.dtype.itemsize for w in ws)
    bias_bytes = 2 * bias.size * bias.dtype.itemsize
    io_bytes = 2 * tm * K0 * x.dtype.itemsize + 2 * tm * out_features * x.dtype.itemsize
    n_max = max(w.shape[1] for w in ws)
    act_bytes = 4 * tm * n_max * 4       # generous f32 working-set estimate
    needed = weight_bytes + bias_bytes + io_bytes + act_bytes
    try:
        physical_vmem = pltpu.get_tpu_info().vmem_capacity_bytes   # 64 MiB v7x, 128 MiB v5e/v6e
    except Exception:                                              # pragma: no cover
        physical_vmem = 64 * 1024 * 1024
    budget = (physical_vmem * 3) // 4
    assert needed <= budget, (
        f"MLP weights + tiles need ~{needed >> 20} MiB VMEM > ~{budget >> 20} MiB budget "
        "on this TPU; use a per-layer K-tiled matmul fallback.")
    vmem_limit = None
    if needed > DEFAULT_SCOPED_VMEM:
        vmem_limit = int(min(needed + (4 << 20), budget))

    # --- specs: x tiled over batch; weights/biases grid-invariant (stay VMEM-resident) ---
    in_specs = [pl.BlockSpec((tm, K0), lambda i: (i, 0))]
    for w in ws:
        kp, np_ = w.shape
        in_specs.append(pl.BlockSpec((kp, np_), lambda i: (0, 0)))
    in_specs.append(pl.BlockSpec(bias.shape, lambda i: (0, 0)))

    kernel = functools.partial(_fused_mlp_kernel,
                               relu_flags=tuple(relu_flags),
                               compute_dtype=compute_dtype)
    out = pl.pallas_call(
        kernel,
        out_shape=jax.ShapeDtypeStruct((M_pad, out_features), x.dtype),
        grid_spec=pltpu.PrefetchScalarGridSpec(
            num_scalar_prefetch=0,
            grid=(M_pad // tm,),
            in_specs=in_specs,
            out_specs=pl.BlockSpec((tm, out_features), lambda i: (i, 0)),
        ),
        compiler_params=pltpu.CompilerParams(
            dimension_semantics=("parallel",),   # v7x: two TCs split the batch tiles
            vmem_limit_bytes=vmem_limit,
        ),
    )(x, *ws, bias)
    return out if M_pad == M else out[:M]


def mlp_forward(params, x, out_nonlinearity=False, *,
                compute_dtype=jnp.bfloat16, block_m=512):
    """Reproduces MLP.forward: Linear -> ReLU for all but the last layer
    (normalize=False, nonlinearity=ReLU, out_nonlinearity=None by default)."""
    n_layers = len(params)
    relu_flags = [(j != n_layers - 1) or bool(out_nonlinearity) for j in range(n_layers)]
    ws, bias = prepare_mlp_params(params, compute_dtype=compute_dtype)
    return mlp_forward_fused(ws, bias, x, relu_flags,
                             block_m=block_m, compute_dtype=compute_dtype)


if __name__ == "__main__":
    key = jax.random.PRNGKey(0)
    layers = [32, 64, 64, 16]            # MLP([32, 64, 64, 16], nn.ReLU)
    batch = 8

    key, kx = jax.random.split(key)
    x = jax.random.normal(kx, (batch, layers[0]), jnp.float32)
    params = init_mlp_params(key, layers)

    # Pure-JAX reference.
    ref = x
    for j, (w, b) in enumerate(params):
        ref = ref @ w.T + b
        if j != len(params) - 1:
            ref = jnp.maximum(ref, 0.0)

    # f32 escape hatch: tight tolerance against the reference.
    y32 = jax.block_until_ready(mlp_forward(params, x, compute_dtype=jnp.float32))
    assert y32.shape == (batch, layers[-1])
    assert jnp.allclose(y32, ref, atol=1e-5, rtol=1e-5), "f32 path mismatch vs reference"

    # Default bf16 MXU-feed path (f32 accumulate): dtype-aware tolerance.
    ybf = jax.block_until_ready(mlp_forward(params, x))
    assert ybf.shape == (batch, layers[-1])
    assert jnp.allclose(ybf, ref, atol=3e-2, rtol=3e-2), "bf16 path mismatch vs reference"

    print("KERNEL_OK")
</pallas_src>

<mosaic_0001>
module attributes {stable_mosaic.version = 11 : i64} {
  func.func @_fused_mlp_kernel(%arg0: i32, %arg1: memref<8x32xf32, #tpu.memory_space<vmem>>, %arg2: memref<32x128xf32, #tpu.memory_space<vmem>>, %arg3: memref<128x128xf32, #tpu.memory_space<vmem>>, %arg4: memref<128x16xf32, #tpu.memory_space<vmem>>, %arg5: memref<3x128xf32, #tpu.memory_space<vmem>>, %arg6: memref<8x16xf32, #tpu.memory_space<vmem>>) attributes {dimension_semantics = [#tpu.dimension_semantics<parallel>], iteration_bounds = array<i64: 1>, scalar_prefetch = 0 : i64, scratch_operands = 0 : i64, tpu.core_type = #tpu.core_type<tc>, window_params = [{transform_indices = @transform_0, window_bounds = array<i64: 8, 32>}, {pipeline_mode = #tpu.pipeline_mode<synchronous>, transform_indices = @transform_1, window_bounds = array<i64: 32, 128>}, {pipeline_mode = #tpu.pipeline_mode<synchronous>, transform_indices = @transform_2, window_bounds = array<i64: 128, 128>}, {pipeline_mode = #tpu.pipeline_mode<synchronous>, transform_indices = @transform_3, window_bounds = array<i64: 128, 16>}, {pipeline_mode = #tpu.pipeline_mode<synchronous>, transform_indices = @transform_4, window_bounds = array<i64: 3, 128>}, {transform_indices = @transform_5, window_bounds = array<i64: 8, 16>}]} {
    %c0 = arith.constant 0 : index
    %c0_0 = arith.constant 0 : index
    %0 = vector.load %arg1[%c0, %c0_0] : memref<8x32xf32, #tpu.memory_space<vmem>>, vector<8x32xf32>
    %c0_1 = arith.constant 0 : index
    %c0_2 = arith.constant 0 : index
    %1 = vector.load %arg2[%c0_1, %c0_2] : memref<32x128xf32, #tpu.memory_space<vmem>>, vector<32x128xf32>
    %cst = arith.constant dense<0.000000e+00> : vector<8x128xf32>
    %2 = tpu.matmul %0, %1, %cst {dimension_numbers = #tpu.dot_dimension_numbers<[1], [0], [0], [1], [0, 0, 1, 1], [], []>} : vector<8x32xf32>, vector<32x128xf32>, vector<8x128xf32> -> vector<8x128xf32>
    %c0_3 = arith.constant 0 : index
    %c0_4 = arith.constant 0 : index
    %3 = vector.load %arg5[%c0_3, %c0_4] : memref<3x128xf32, #tpu.memory_space<vmem>>, vector<1x128xf32>
    %4 = vector.broadcast %3 : vector<1x128xf32> to vector<8x128xf32>
    %5 = arith.addf %2, %4 : vector<8x128xf32>
    %cst_5 = arith.constant 0.000000e+00 : f32
    %6 = vector.broadcast %cst_5 : f32 to vector<8x128xf32>
    %7 = arith.maximumf %5, %6 : vector<8x128xf32>
    %c0_6 = arith.constant 0 : index
    %c0_7 = arith.constant 0 : index
    %8 = vector.load %arg3[%c0_6, %c0_7] : memref<128x128xf32, #tpu.memory_space<vmem>>, vector<128x128xf32>
    %cst_8 = arith.constant dense<0.000000e+00> : vector<8x128xf32>
    %9 = tpu.matmul %7, %8, %cst_8 {dimension_numbers = #tpu.dot_dimension_numbers<[1], [0], [0], [1], [0, 0, 1, 1], [], []>} : vector<8x128xf32>, vector<128x128xf32>, vector<8x128xf32> -> vector<8x128xf32>
    %c1 = arith.constant 1 : index
    %c0_9 = arith.constant 0 : index
    %10 = vector.load %arg5[%c1, %c0_9] : memref<3x128xf32, #tpu.memory_space<vmem>>, vector<1x128xf32>
    %11 = vector.broadcast %10 : vector<1x128xf32> to vector<8x128xf32>
    %12 = arith.addf %9, %11 : vector<8x128xf32>
    %cst_10 = arith.constant 0.000000e+00 : f32
    %13 = vector.broadcast %cst_10 : f32 to vector<8x128xf32>
    %14 = arith.maximumf %12, %13 : vector<8x128xf32>
    %c0_11 = arith.constant 0 : index
    %c0_12 = arith.constant 0 : index
    %15 = vector.load %arg4[%c0_11, %c0_12] : memref<128x16xf32, #tpu.memory_space<vmem>>, vector<128x16xf32>
    %cst_13 = arith.constant dense<0.000000e+00> : vector<8x16xf32>
    %16 = tpu.matmul %14, %15, %cst_13 {dimension_numbers = #tpu.dot_dimension_numbers<[1], [0], [0], [1], [0, 0, 1, 1], [], []>} : vector<8x128xf32>, vector<128x16xf32>, vector<8x16xf32> -> vector<8x16xf32>
    %c2 = arith.constant 2 : index
    %c0_14 = arith.constant 0 : index
    %17 = vector.load %arg5[%c2, %c0_14] : memref<3x128xf32, #tpu.memory_space<vmem>>, vector<1x16xf32>
    %18 = vector.broadcast %17 : vector<1x16xf32> to vector<8x16xf32>
    %19 = arith.addf %16, %18 : vector<8x16xf32>
    %c0_15 = arith.constant 0 : index
    %c0_16 = arith.constant 0 : index
    %20 = vector.load %arg6[%c0_15, %c0_16] : memref<8x16xf32, #tpu.memory_space<vmem>>, vector<8x16xf32>
    tpu.vector_store %arg6[%c0_15, %c0_16], %19 {strides = array<i32>} : memref<8x16xf32, #tpu.memory_space<vmem>>, vector<8x16xf32>,
    return
  }
  func.func @transform_0(%arg0: i32) -> (i32, i32) {
    %c0_i32 = arith.constant 0 : i32
    %c0_i32_0 = arith.constant 0 : i32
    return %arg0, %c0_i32 : i32, i32
  }
  func.func @transform_1(%arg0: i32) -> (i32, i32) {
    %c0_i32 = arith.constant 0 : i32
    %c0_i32_0 = arith.constant 0 : i32
    %c0_i32_1 = arith.constant 0 : i32
    return %c0_i32, %c0_i32_0 : i32, i32
  }
  func.func @transform_2(%arg0: i32) -> (i32, i32) {
    %c0_i32 = arith.constant 0 : i32
    %c0_i32_0 = arith.constant 0 : i32
    %c0_i32_1 = arith.constant 0 : i32
    return %c0_i32, %c0_i32_0 : i32, i32
  }
  func.func @transform_3(%arg0: i32) -> (i32, i32) {
    %c0_i32 = arith.constant 0 : i32
    %c0_i32_0 = arith.constant 0 : i32
    %c0_i32_1 = arith.constant 0 : i32
    return %c0_i32, %c0_i32_0 : i32, i32
  }
  func.func @transform_4(%arg0: i32) -> (i32, i32) {
    %c0_i32 = arith.constant 0 : i32
    %c0_i32_0 = arith.constant 0 : i32
    %c0_i32_1 = arith.constant 0 : i32
    return %c0_i32, %c0_i32_0 : i32, i32
  }
  func.func @transform_5(%arg0: i32) -> (i32, i32) {
    %c0_i32 = arith.constant 0 : i32
    %c0_i32_0 = arith.constant 0 : i32
    return %arg0, %c0_i32 : i32, i32
  }
}

</mosaic_0001>

<llo_original>
// kernel: tpu_custom_call.1
$region0: #{tpu_custom_call.1}
  #allocation0 [shape = 'u32[]', space=smem, size = 0x4, offset = 0x4, fixed_abs, tag = 'smem constant byte address 0x4 - core index']
  #allocation1 [shape = 'u32[144,128]{1,0:T(1,128)}', space=vmem, size = 0x12000, scoped, tag = 'internal scratch']
  %s0 = inlined_call_operand.vmem [shape: f32[8,32], index: 0, kind: input, shape index: {}]
  %s1 = inlined_call_operand.hbm [shape: f32[32,128], index: 1, kind: input, shape index: {}]
  %s2 = inlined_call_operand.vmem [shape: f32[128,128], index: 2, kind: input, shape index: {}]
  %s3 = inlined_call_operand.vmem [shape: f32[128,16], index: 3, kind: input, shape index: {}]
  %s4 = inlined_call_operand.vmem [shape: f32[3,128], index: 4, kind: input, shape index: {}]
  %s5 = inlined_call_operand.hbm [shape: f32[8,16], index: 5, kind: output, shape index: {}]
  %s6 = sld [smem:[#allocation0]]
  $region34: #{tpu_custom_call.1} parent=0
    _
  %s8 = ssub.s32 1, %s6
  %s9 = scalar_select 0, %s8, %s6
  $region1: #{tpu_custom_call.1} parent=0
    #allocation2 [shape = 'u8[16384]{0}', space=vmem, size = 0x4000, scoped, tag = 'input window, operand 1, single buffered']
    #allocation3 [shape = 's32[1]{0}', space=sflag, size = 0x4, scoped, tag = 'scoped memory for tpu_custom_call.1']
    #allocation4 [shape = 's32[1]{0}', space=sflag, size = 0x4, scoped, tag = 'scoped memory for tpu_custom_call.1']
    #allocation5 [shape = 'u8[4096]{0}', space=vmem, size = 0x1000, scoped, tag = 'output window, operand 0, single buffered']
    %10 = vsyncpa [#allocation3], 0
    %11 = vsyncpa [#allocation4], 0
    // Predicated region
    $region2: #{tpu_custom_call.1} parent=1 // pred_check
      _
    $region3: #{tpu_custom_call.1} parent=1 // pred_check_branch
      %13 = sbr.rel (0) target = $region5
    $region4: #{tpu_custom_call.1} parent=1 // pred_region
      _
    $region5: #{tpu_custom_call.1} parent=1 // pred_fallthru
      _
    // Predicated region
    $region6: #{tpu_custom_call.1} parent=1 // pred_check
      _
    $region7: #{tpu_custom_call.1} parent=1 // pred_check_branch
      %15 = sbr.rel (0) target = $region9
    $region8: #{tpu_custom_call.1} parent=1 // pred_region
      %s17 = ssub.s32 512, 512
      %18 = vsyncadd [#allocation3], %s17
      %s19 = sshll.u32 [#allocation2], 4
      %s20 = int_to_ptr.vmem [resolvable:$true] %s19
      %25 = dma.hbm_to_vmem [thread:$0]  %s1, 512, %s20, [#allocation3], 128, 128, 8
    $region9: #{tpu_custom_call.1} parent=1 // pred_fallthru
      _
    // Predicated region
    $region10: #{tpu_custom_call.1} parent=1 // pred_check
      _
    $region11: #{tpu_custom_call.1} parent=1 // pred_check_branch
      %27 = sbr.rel (0) target = $region13
    $region12: #{tpu_custom_call.1} parent=1 // pred_region
      _
    $region13: #{tpu_custom_call.1} parent=1 // pred_fallthru
      _
    // Predicated region
    $region14: #{tpu_custom_call.1} parent=1 // pred_check
      _
    $region15: #{tpu_custom_call.1} parent=1 // pred_check_branch
      %29 = sbr.rel (0) target = $region17
    $region16: #{tpu_custom_call.1} parent=1 // pred_region
      _
    $region17: #{tpu_custom_call.1} parent=1 // pred_fallthru
      _
    // Predicated region
    $region18: #{tpu_custom_call.1} parent=1 // pred_check
      _
    $region19: #{tpu_custom_call.1} parent=1 // pred_check_branch
      %31 = sbr.rel (0) target = $region21
    $region20: #{tpu_custom_call.1} parent=1 // pred_region
      _
    $region21: #{tpu_custom_call.1} parent=1 // pred_fallthru
      _
    // Predicated region
    $region22: #{tpu_custom_call.1} parent=1 // pred_check
      _
    $region23: #{tpu_custom_call.1} parent=1 // pred_check_branch
      %33 = sbr.rel (0) target = $region25
    $region24: #{tpu_custom_call.1} parent=1 // pred_region
      %34 = dma.done [#allocation3], 512
    $region25: #{tpu_custom_call.1} parent=1 // pred_fallthru
      _
    %v35 = vld [vmem:[%s0] sm:$0xff]
    %v36 = vld [vmem:[#allocation2] sm:$0xff]
    %v37 = vld [vmem:[#allocation2 + $0x8] sm:$0xff]
    %v38 = vld [vmem:[#allocation2 + $0x10] sm:$0xff]
    %v39 = vld [vmem:[#allocation2 + $0x18] sm:$0xff]
    %v40 = vld [vmem:[%s4] sm:$0x1]
    %v41 = vlaneseq
    %v42 = vshrl.u32 %v41, 7
    %v43 = vsub.s32 0, %v42
    %v44 = vrot.slane %v40, %v43
    %vm45 = vcmask 261120
    %v47 = vsel %vm45, %v35, 0
    %49 = vmatprep.subr.mxu0 0.0
    %50 = vmatpush1.msra.mxu0 %v36
    %51 = vmatprep.subr.mxu0 0.0
    %52 = vmatpush1.msra.mxu0 %v37
    %53 = vmatprep.subr.mxu0 0.0
    %54 = vmatpush1.msra.mxu0 %v38
    %55 = vmatprep.subr.mxu0 0.0
    %56 = vmatpush1.msra.mxu0 %v39
    %57 = vmatprep.subr.mxu0 0.0
    %58 = vmatpush1.msra.mxu0 0.0
    %59 = vmatprep.subr.mxu0 0.0
    %60 = vmatpush1.msra.mxu0 0.0
    %61 = vmatprep.subr.mxu0 0.0
    %62 = vmatpush1.msra.mxu0 0.0
    %63 = vmatprep.subr.mxu0 0.0
    %64 = vmatpush1.msra.mxu0 0.0
    %65 = vmatprep.subr.mxu0 0.0
    %66 = vmatpush1.msra.mxu0 0.0
    %67 = vmatprep.subr.mxu0 0.0
    %68 = vmatpush1.msra.mxu0 0.0
    %69 = vmatprep.subr.mxu0 0.0
    %70 = vmatpush1.msra.mxu0 0.0
    %71 = vmatprep.subr.mxu0 0.0
    %72 = vmatpush1.msra.mxu0 0.0
    %73 = vmatprep.subr.mxu0 0.0
    %74 = vmatpush1.msra.mxu0 0.0
    %75 = vmatprep.subr.mxu0 0.0
    %76 = vmatpush1.msra.mxu0 0.0
    %77 = vmatprep.subr.mxu0 0.0
    %78 = vmatpush1.msra.mxu0 0.0
    %79 = vmatprep.subr.mxu0 0.0
    %80 = vmatpush1.msra.mxu0 0.0
    %81 = vmatprep.subr.mxu0 0.0
    %82 = vmatpush1.msra.mxu0 0.0
    %83 = vmatprep.subr.mxu0 0.0
    %84 = vmatpush1.msra.mxu0 0.0
    %85 = vmatprep.subr.mxu0 0.0
    %86 = vmatpush1.msra.mxu0 0.0
    %87 = vmatprep.subr.mxu0 0.0
    %88 = vmatpush1.msra.mxu0 0.0
    %89 = vmatprep.subr.mxu0 0.0
    %90 = vmatpush1.msra.mxu0 0.0
    %91 = vmatprep.subr.mxu0 0.0
    %92 = vmatpush1.msra.mxu0 0.0
    %93 = vmatprep.subr.mxu0 0.0
    %94 = vmatpush1.msra.mxu0 0.0
    %95 = vmatprep.subr.mxu0 0.0
    %96 = vmatpush1.msra.mxu0 0.0
    %97 = vmatprep.subr.mxu0 0.0
    %98 = vmatpush1.msra.mxu0 0.0
    %99 = vmatprep.subr.mxu0 0.0
    %100 = vmatpush1.msra.mxu0 0.0
    %101 = vmatprep.subr.mxu0 0.0
    %102 = vmatpush1.msra.mxu0 0.0
    %103 = vmatprep.subr.mxu0 0.0
    %104 = vmatpush1.msra.mxu0 0.0
    %105 = vmatprep.subr.mxu0 0.0
    %106 = vmatpush1.msra.mxu0 0.0
    %107 = vmatprep.subr.mxu0 0.0
    %108 = vmatpush1.msra.mxu0 0.0
    %109 = vmatprep.subr.mxu0 0.0
    %110 = vmatpush1.msra.mxu0 0.0
    %111 = vmatprep.subr.mxu0 0.0
    %112 = vmatpush1.msra.mxu0 0.0
    %113 = vmatprep.mubr.f32.mxu0 0.0
    %114 = vmatmul.mubr.f32.gmra.mrb[0].mxu0 %v47
    %v115 = vpop.f32.mrb[0].mxu0
    %v116 = vadd.f32 %v44, %v115
    %v117 = vpop.f32.mrb[0].mxu0
    %118 = vdwg.mxu0
    %v119 = vmax.f32 %v116, 0.0
    %v120 = vld [vmem:[%s2] sm:$0xff]
    %v121 = vld [vmem:[%s2 + $0x8] sm:$0xff]
    %v122 = vld [vmem:[%s2 + $0x10] sm:$0xff]
    %v123 = vld [vmem:[%s2 + $0x18] sm:$0xff]
    %v124 = vld [vmem:[%s2 + $0x20] sm:$0xff]
    %v125 = vld [vmem:[%s2 + $0x28] sm:$0xff]
    %v126 = vld [vmem:[%s2 + $0x30] sm:$0xff]
    %v127 = vld [vmem:[%s2 + $0x38] sm:$0xff]
    %v128 = vld [vmem:[%s2 + $0x40] sm:$0xff]
    %v129 = vld [vmem:[%s2 + $0x48] sm:$0xff]
    %v130 = vld [vmem:[%s2 + $0x50] sm:$0xff]
    %v131 = vld [vmem:[%s2 + $0x58] sm:$0xff]
    %v132 = vld [vmem:[%s2 + $0x60] sm:$0xff]
    %v133 = vld [vmem:[%s2 + $0x68] sm:$0xff]
    %v134 = vld [vmem:[%s2 + $0x70] sm:$0xff]
    %v135 = vld [vmem:[%s2 + $0x78] sm:$0xff]
    %v136 = vld [vmem:[%s4 + $0x1] sm:$0x1]
    %v137 = vlaneseq
    %v138 = vshrl.u32 %v137, 7
    %v139 = vsub.s32 0, %v138
    %v140 = vrot.slane %v136, %v139
    %141 = vmatprep.subr.mxu0 0.0
    %142 = vmatpush1.msra.mxu0 %v120
    %143 = vmatprep.subr.mxu0 0.0
    %144 = vmatpush1.msra.mxu0 %v121
    %145 = vmatprep.subr.mxu0 0.0
    %146 = vmatpush1.msra.mxu0 %v122
    %147 = vmatprep.subr.mxu0 0.0
    %148 = vmatpush1.msra.mxu0 %v123
    %149 = vmatprep.subr.mxu0 0.0
    %150 = vmatpush1.msra.mxu0 %v124
    %151 = vmatprep.subr.mxu0 0.0
    %152 = vmatpush1.msra.mxu0 %v125
    %153 = vmatprep.subr.mxu0 0.0
    %154 = vmatpush1.msra.mxu0 %v126
    %155 = vmatprep.subr.mxu0 0.0
    %156 = vmatpush1.msra.mxu0 %v127
    %157 = vmatprep.subr.mxu0 0.0
    %158 = vmatpush1.msra.mxu0 %v128
    %159 = vmatprep.subr.mxu0 0.0
    %160 = vmatpush1.msra.mxu0 %v129
    %161 = vmatprep.subr.mxu0 0.0
    %162 = vmatpush1.msra.mxu0 %v130
    %163 = vmatprep.subr.mxu0 0.0
    %164 = vmatpush1.msra.mxu0 %v131
    %165 = vmatprep.subr.mxu0 0.0
    %166 = vmatpush1.msra.mxu0 %v132
    %167 = vmatprep.subr.mxu0 0.0
    %168 = vmatpush1.msra.mxu0 %v133
    %169 = vmatprep.subr.mxu0 0.0
    %170 = vmatpush1.msra.mxu0 %v134
    %171 = vmatprep.subr.mxu0 0.0
    %172 = vmatpush1.msra.mxu0 %v135
    %173 = vmatprep.subr.mxu0 0.0
    %174 = vmatpush1.msra.mxu0 0.0
    %175 = vmatprep.subr.mxu0 0.0
    %176 = vmatpush1.msra.mxu0 0.0
    %177 = vmatprep.subr.mxu0 0.0
    %178 = vmatpush1.msra.mxu0 0.0
    %179 = vmatprep.subr.mxu0 0.0
    %180 = vmatpush1.msra.mxu0 0.0
    %181 = vmatprep.subr.mxu0 0.0
    %182 = vmatpush1.msra.mxu0 0.0
    %183 = vmatprep.subr.mxu0 0.0
    %184 = vmatpush1.msra.mxu0 0.0
    %185 = vmatprep.subr.mxu0 0.0
    %186 = vmatpush1.msra.mxu0 0.0
    %187 = vmatprep.subr.mxu0 0.0
    %188 = vmatpush1.msra.mxu0 0.0
    %189 = vmatprep.subr.mxu0 0.0
    %190 = vmatpush1.msra.mxu0 0.0
    %191 = vmatprep.subr.mxu0 0.0
    %192 = vmatpush1.msra.mxu0 0.0
    %193 = vmatprep.subr.mxu0 0.0
    %194 = vmatpush1.msra.mxu0 0.0
    %195 = vmatprep.subr.mxu0 0.0
    %196 = vmatpush1.msra.mxu0 0.0
    %197 = vmatprep.subr.mxu0 0.0
    %198 = vmatpush1.msra.mxu0 0.0
    %199 = vmatprep.subr.mxu0 0.0
    %200 = vmatpush1.msra.mxu0 0.0
    %201 = vmatprep.subr.mxu0 0.0
    %202 = vmatpush1.msra.mxu0 0.0
    %203 = vmatprep.subr.mxu0 0.0
    %204 = vmatpush1.msra.mxu0 0.0
    %205 = vmatprep.mubr.f32.mxu0 0.0
    %206 = vmatmul.mubr.f32.gmra.mrb[0].mxu0 %v119
    %v207 = vpop.f32.mrb[0].mxu0
    %v208 = vadd.f32 %v140, %v207
    %v209 = vpop.f32.mrb[0].mxu0
    %210 = vdwg.mxu0
    %v211 = vmax.f32 %v208, 0.0
    %v212 = vld [vmem:[%s3] sm:$0xff]
    %v213 = vld [vmem:[%s3 + $0x8] sm:$0xff]
    %v214 = vld [vmem:[%s3 + $0x10] sm:$0xff]
    %v215 = vld [vmem:[%s3 + $0x18] sm:$0xff]
    %v216 = vld [vmem:[%s3 + $0x20] sm:$0xff]
    %v217 = vld [vmem:[%s3 + $0x28] sm:$0xff]
    %v218 = vld [vmem:[%s3 + $0x30] sm:$0xff]
    %v219 = vld [vmem:[%s3 + $0x38] sm:$0xff]
    %v220 = vld [vmem:[%s3 + $0x40] sm:$0xff]
    %v221 = vld [vmem:[%s3 + $0x48] sm:$0xff]
    %v222 = vld [vmem:[%s3 + $0x50] sm:$0xff]
    %v223 = vld [vmem:[%s3 + $0x58] sm:$0xff]
    %v224 = vld [vmem:[%s3 + $0x60] sm:$0xff]
    %v225 = vld [vmem:[%s3 + $0x68] sm:$0xff]
    %v226 = vld [vmem:[%s3 + $0x70] sm:$0xff]
    %v227 = vld [vmem:[%s3 + $0x78] sm:$0xff]
    %v228 = vld [vmem:[%s4 + $0x2] sm:$0x1]
    %v229 = vlaneseq
    %v230 = vshrl.u32 %v229, 7
    %v231 = vsub.s32 0, %v230
    %v232 = vrot.slane %v228, %v231
    %233 = vmatprep.subr.mxu0 0.0
    %234 = vmatpush1.msra.mxu0 %v212
    %235 = vmatprep.subr.mxu0 0.0
    %236 = vmatpush1.msra.mxu0 %v213
    %237 = vmatprep.subr.mxu0 0.0
    %238 = vmatpush1.msra.mxu0 %v214
    %239 = vmatprep.subr.mxu0 0.0
    %240 = vmatpush1.msra.mxu0 %v215
    %241 = vmatprep.subr.mxu0 0.0
    %242 = vmatpush1.msra.mxu0 %v216
    %243 = vmatprep.subr.mxu0 0.0
    %244 = vmatpush1.msra.mxu0 %v217
    %245 = vmatprep.subr.mxu0 0.0
    %246 = vmatpush1.msra.mxu0 %v218
    %247 = vmatprep.subr.mxu0 0.0
    %248 = vmatpush1.msra.mxu0 %v219
    %249 = vmatprep.subr.mxu0 0.0
    %250 = vmatpush1.msra.mxu0 %v220
    %251 = vmatprep.subr.mxu0 0.0
    %252 = vmatpush1.msra.mxu0 %v221
    %253 = vmatprep.subr.mxu0 0.0
    %254 = vmatpush1.msra.mxu0 %v222
    %255 = vmatprep.subr.mxu0 0.0
    %256 = vmatpush1.msra.mxu0 %v223
    %257 = vmatprep.subr.mxu0 0.0
    %258 = vmatpush1.msra.mxu0 %v224
    %259 = vmatprep.subr.mxu0 0.0
    %260 = vmatpush1.msra.mxu0 %v225
    %261 = vmatprep.subr.mxu0 0.0
    %262 = vmatpush1.msra.mxu0 %v226
    %263 = vmatprep.subr.mxu0 0.0
    %264 = vmatpush1.msra.mxu0 %v227
    %265 = vmatprep.subr.mxu0 0.0
    %266 = vmatpush1.msra.mxu0 0.0
    %267 = vmatprep.subr.mxu0 0.0
    %268 = vmatpush1.msra.mxu0 0.0
    %269 = vmatprep.subr.mxu0 0.0
    %270 = vmatpush1.msra.mxu0 0.0
    %271 = vmatprep.subr.mxu0 0.0
    %272 = vmatpush1.msra.mxu0 0.0
    %273 = vmatprep.subr.mxu0 0.0
    %274 = vmatpush1.msra.mxu0 0.0
    %275 = vmatprep.subr.mxu0 0.0
    %276 = vmatpush1.msra.mxu0 0.0
    %277 = vmatprep.subr.mxu0 0.0
    %278 = vmatpush1.msra.mxu0 0.0
    %279 = vmatprep.subr.mxu0 0.0
    %280 = vmatpush1.msra.mxu0 0.0
    %281 = vmatprep.subr.mxu0 0.0
    %282 = vmatpush1.msra.mxu0 0.0
    %283 = vmatprep.subr.mxu0 0.0
    %284 = vmatpush1.msra.mxu0 0.0
    %285 = vmatprep.subr.mxu0 0.0
    %286 = vmatpush1.msra.mxu0 0.0
    %287 = vmatprep.subr.mxu0 0.0
    %288 = vmatpush1.msra.mxu0 0.0
    %289 = vmatprep.subr.mxu0 0.0
    %290 = vmatpush1.msra.mxu0 0.0
    %291 = vmatprep.subr.mxu0 0.0
    %292 = vmatpush1.msra.mxu0 0.0
    %293 = vmatprep.subr.mxu0 0.0
    %294 = vmatpush1.msra.mxu0 0.0
    %295 = vmatprep.subr.mxu0 0.0
    %296 = vmatpush1.msra.mxu0 0.0
    %297 = vmatprep.mubr.f32.mxu0 0.0
    %298 = vmatmul.mubr.f32.gmra.mrb[0].mxu0 %v211
    %v299 = vpop.f32.mrb[0].mxu0
    %v300 = vadd.f32 %v232, %v299
    %v301 = vpop.f32.mrb[0].mxu0
    %302 = vdwg.mxu0
    %vm303 = vcmask 130048
    %304 = vst.msk [vmem:[#allocation5] sm:$0xff] %vm303, %v300
    // Predicated region
    $region26: #{tpu_custom_call.1} parent=1 // pred_check
      _
    $region27: #{tpu_custom_call.1} parent=1 // pred_check_branch
      %306 = sbr.rel (0) target = $region29
    $region28: #{tpu_custom_call.1} parent=1 // pred_region
      %s308 = ssub.s32 128, 128
      %309 = vsyncadd [#allocation4], %s308
      %s311 = sshll.u32 [#allocation5], 4
      %s312 = int_to_ptr.vmem [resolvable:$true] %s311
      %314 = dma.vmem_to_hbm [thread:$0]  %s312, 128, %s5, [#allocation4]
    $region29: #{tpu_custom_call.1} parent=1 // pred_fallthru
      _
    // Predicated region
    $region30: #{tpu_custom_call.1} parent=1 // pred_check
      _
    $region31: #{tpu_custom_call.1} parent=1 // pred_check_branch
      %316 = sbr.rel (0) target = $region33
    $region32: #{tpu_custom_call.1} parent=1 // pred_region
      %317 = dma.done [#allocation4], 128
    $region33: #{tpu_custom_call.1} parent=1 // pred_fallthru
      _
    %318 = vsyncpa [#allocation3], 1
    %319 = vsyncpa [#allocation4], 1

</llo_original>
